<compile_context>
chip_gen: v5e
topology: v5e:2x2
jax: 0.10.0
libtpu: 0.0.40
codegen_flags: <defaults>
</compile_context>

<pallas_src>
import functools

import jax
import jax.numpy as jnp
from jax.experimental import pallas as pl
from jax.experimental.pallas import tpu as pltpu


def _round_up(x: int, m: int) -> int:
    return ((x + m - 1) // m) * m


def _sublane_multiple(dtype) -> int:
    # Packed-sublane multiple: 8 for 32-bit, 16 for bf16, 32 for 8-bit dtypes.
    return max(8, 32 // jnp.dtype(dtype).itemsize)


def _vmem_capacity_bytes() -> int:
    try:
        return int(pltpu.get_tpu_info().vmem_capacity_bytes)
    except Exception:
        return 64 * 1024 * 1024  # conservative fallback: v7x per-TensorCore VMEM


def _vmem_budgets():
    cap = _vmem_capacity_bytes()
    working_set_budget = min(int(cap * 0.55), 96 << 20)   # ~35 MiB on v7x, ~70 MiB on v5e/v6e
    vmem_limit = min(int(cap * 0.75), 100 << 20)           # ~48 MiB on v7x, ~96 MiB on v5e/v6e
    return working_set_budget, vmem_limit


# ----------------------------------------------------------------------------
# MXU path (float32 / bfloat16): selector matmul -> lane-dense output slabs.
# ----------------------------------------------------------------------------
def _matmul_kernel(t_ref, o_ref, *, out_dim: int, split_f32: bool):
    # t_ref: (blk_n, td)            VMEM
    # o_ref: (blk_n, td*out_dim)    VMEM, lane-dense output slab
    blk_n, td = t_ref.shape
    m = td * out_dim

    # Static 0/1 block-diagonal selector built in-kernel from iotas (no HBM
    # input, no buffered VMEM copy).  sel[c, j*out_dim+k] = 1 iff j == c.
    col = jax.lax.broadcasted_iota(jnp.int32, (td, m), 1)
    row = jax.lax.broadcasted_iota(jnp.int32, (td, m), 0) * out_dim
    sel = ((col >= row) & (col < row + out_dim)).astype(jnp.bfloat16)

    x = t_ref[...]
    if split_f32:
        # Exact f32 copy in 3 DEFAULT-precision bf16 MXU passes:
        # x = hi + mid + lo (each residual exactly representable), rhs is a
        # single exact bf16 term (0/1), accumulation in f32.
        hi = x.astype(jnp.bfloat16)
        r1 = x - hi.astype(jnp.float32)
        mid = r1.astype(jnp.bfloat16)
        lo = (r1 - mid.astype(jnp.float32)).astype(jnp.bfloat16)
        acc = jnp.dot(hi, sel, preferred_element_type=jnp.float32)
        acc = acc + jnp.dot(mid, sel, preferred_element_type=jnp.float32)
        acc = acc + jnp.dot(lo, sel, preferred_element_type=jnp.float32)
    else:
        # bf16 input: single bf16 pass, f32 accumulate, cast back (exact).
        acc = jnp.dot(x, sel, preferred_element_type=jnp.float32)
    o_ref[...] = acc.astype(o_ref.dtype)


def _time_identity_matmul(t2d: jax.Array, out_dim: int) -> jax.Array:
    N, D = t2d.shape
    dtype = t2d.dtype
    split_f32 = dtype == jnp.float32
    in_sz = jnp.dtype(dtype).itemsize
    out_sz = in_sz  # output emitted directly in the input dtype

    # Column tile over D: exploit the block-diagonal structure of the selector.
    td = 128 if (D > 128 and D % 128 == 0) else D
    m = td * out_dim

    align = _sublane_multiple(dtype)
    budget, vmem_limit = _vmem_budgets()

    # Per-row working set: double-buffered input + output blocks plus a
    # conservative allowance for the in-kernel f32 accumulator / bf16 splits.
    per_row = 2 * td * in_sz + 2 * m * out_sz + 2 * m * 4 + 8 * td
    max_rows = max(align, (budget // per_row) // align * align)

    # Target a multi-MiB output slab per grid step (amortizes ~0.35us/step).
    target_rows = max(align, ((4 << 20) // (m * out_sz)) // align * align)

    blk_n = int(min(target_rows, max_rows, _round_up(N, align)))
    n_pass = 3 if split_f32 else 1
    grid = (pl.cdiv(N, blk_n), D // td)

    kernel = functools.partial(_matmul_kernel, out_dim=out_dim, split_f32=split_f32)

    return pl.pallas_call(
        kernel,
        out_shape=jax.ShapeDtypeStruct((N, D * out_dim), dtype),
        grid_spec=pltpu.PrefetchScalarGridSpec(
            num_scalar_prefetch=0,
            grid=grid,
            in_specs=[pl.BlockSpec((blk_n, td), lambda i, j: (i, j))],
            out_specs=pl.BlockSpec((blk_n, m), lambda i, j: (i, j)),
        ),
        compiler_params=pltpu.CompilerParams(
            # TODO(synk): on v7x verify "parallel" shards the row axis across
            # both TensorCores; if not, switch axis 0 to pltpu.CORE_PARALLEL.
            dimension_semantics=("parallel", "parallel"),
            vmem_limit_bytes=vmem_limit,
        ),
        cost_estimate=pl.CostEstimate(
            flops=2 * N * D * out_dim * td * n_pass,
            transcendentals=0,
            bytes_accessed=N * D * in_sz + N * D * out_dim * out_sz,
        ),
    )(t2d)


# ----------------------------------------------------------------------------
# Matmul-free path (ints / bool / other dtypes): exact VPU lane-broadcast.
# ----------------------------------------------------------------------------
def _broadcast_kernel(t_ref, o_ref):
    # t_ref: (blk, 1), o_ref: (blk, out_dim) — pure lane-broadcast, exact for
    # every dtype.
    o_ref[...] = jnp.broadcast_to(t_ref[...], o_ref.shape)


def _time_identity_broadcast(t2d: jax.Array, out_dim: int) -> jax.Array:
    N, D = t2d.shape
    dtype = t2d.dtype
    sz = jnp.dtype(dtype).itemsize
    R = N * D
    tcol = t2d.reshape(R, 1)

    align = _sublane_multiple(dtype)
    budget, vmem_limit = _vmem_budgets()

    per_row = 2 * sz + 2 * out_dim * sz
    max_rows = max(align, (budget // per_row) // align * align)
    target_rows = max(align, ((4 << 20) // max(1, out_dim * sz)) // align * align)
    blk = int(min(target_rows, max_rows, _round_up(R, align)))

    out = pl.pallas_call(
        _broadcast_kernel,
        out_shape=jax.ShapeDtypeStruct((R, out_dim), dtype),
        grid_spec=pltpu.PrefetchScalarGridSpec(
            num_scalar_prefetch=0,
            grid=(pl.cdiv(R, blk),),
            in_specs=[pl.BlockSpec((blk, 1), lambda i: (i, 0))],
            out_specs=pl.BlockSpec((blk, out_dim), lambda i: (i, 0)),
        ),
        compiler_params=pltpu.CompilerParams(
            dimension_semantics=("parallel",),
            vmem_limit_bytes=vmem_limit,
        ),
        cost_estimate=pl.CostEstimate(
            flops=0,
            transcendentals=0,
            bytes_accessed=(R + R * out_dim) * sz,
        ),
    )(tcol)
    # TODO(synk): this trailing reshape may cost one XLA relayout copy; kept
    # because this path exists only for exact non-float dtype support.
    return out.reshape(N, D * out_dim)


# ----------------------------------------------------------------------------
# Public wrapper: equivalent of torch's t.repeat_interleave(out_dim, dim=-1).
# ----------------------------------------------------------------------------
def time_identity(t: jax.Array, out_dim: int) -> jax.Array:
    orig_shape = t.shape
    D = orig_shape[-1]
    if out_dim == 1:
        return t

    t2d = t.reshape(-1, D)
    if t2d.dtype == jnp.float32 or t2d.dtype == jnp.bfloat16:
        out2d = _time_identity_matmul(t2d, out_dim)
    else:
        out2d = _time_identity_broadcast(t2d, out_dim)
    return out2d.reshape(*orig_shape[:-1], D * out_dim)


if __name__ == "__main__":
    key = jax.random.PRNGKey(0)
    out_dim = 32

    # Small input consistent with the temporal module: t of shape (batch, seq, D).
    t = jax.random.normal(key, (2, 8, 4), dtype=jnp.float32)
    out = jax.block_until_ready(time_identity(t, out_dim))
    ref = jnp.repeat(t, out_dim, axis=-1)
    assert out.shape == ref.shape, (out.shape, ref.shape)
    assert out.dtype == ref.dtype, (out.dtype, ref.dtype)
    assert jnp.array_equal(out, ref), "f32 mismatch vs jnp.repeat reference"

    # bf16 path (single DEFAULT bf16 MXU pass) — also bit-exact.
    tb = t.astype(jnp.bfloat16)
    outb = jax.block_until_ready(time_identity(tb, out_dim))
    assert jnp.array_equal(outb, jnp.repeat(tb, out_dim, axis=-1)), "bf16 mismatch"

    # integer path (matmul-free broadcast kernel) — exact for wide ints.
    ti = jax.random.randint(key, (2, 8, 4), minval=-(2**30), maxval=2**30, dtype=jnp.int32)
    outi = jax.block_until_ready(time_identity(ti, out_dim))
    assert jnp.array_equal(outi, jnp.repeat(ti, out_dim, axis=-1)), "int32 mismatch"

    print("KERNEL_OK")
</pallas_src>

<mosaic_0001>
module attributes {stable_mosaic.version = 11 : i64} {
  func.func @_matmul_kernel(%arg0: i32, %arg1: i32, %arg2: memref<16x4xf32, #tpu.memory_space<vmem>>, %arg3: memref<16x128xf32, #tpu.memory_space<vmem>>) attributes {dimension_semantics = [#tpu.dimension_semantics<parallel>, #tpu.dimension_semantics<parallel>], iteration_bounds = array<i64: 1, 1>, scalar_prefetch = 0 : i64, scratch_operands = 0 : i64, tpu.core_type = #tpu.core_type<tc>, window_params = [{transform_indices = @transform_0, window_bounds = array<i64: 16, 4>}, {transform_indices = @transform_1, window_bounds = array<i64: 16, 128>}]} {
    %0 = tpu.iota {dimensions = array<i32: 1>} : vector<4x128xi32>
    %1 = tpu.iota {dimensions = array<i32: 0>} : vector<4x128xi32>
    %c32_i32 = arith.constant 32 : i32
    %2 = vector.broadcast %c32_i32 : i32 to vector<4x128xi32>
    %3 = arith.muli %1, %2 : vector<4x128xi32>
    %4 = arith.cmpi sge, %0, %3 : vector<4x128xi32>
    %c32_i32_0 = arith.constant 32 : i32
    %5 = vector.broadcast %c32_i32_0 : i32 to vector<4x128xi32>
    %6 = arith.addi %3, %5 : vector<4x128xi32>
    %7 = arith.cmpi slt, %0, %6 : vector<4x128xi32>
    %8 = arith.andi %4, %7 : vector<4x128xi1>
    %9 = arith.extui %8 : vector<4x128xi1> to vector<4x128xi32>
    %10 = arith.sitofp %9 : vector<4x128xi32> to vector<4x128xf32>
    %11 = arith.truncf %10 : vector<4x128xf32> to vector<4x128xbf16>
    %c0 = arith.constant 0 : index
    %c0_1 = arith.constant 0 : index
    %12 = vector.load %arg2[%c0, %c0_1] : memref<16x4xf32, #tpu.memory_space<vmem>>, vector<16x4xf32>
    %13 = arith.truncf %12 : vector<16x4xf32> to vector<16x4xbf16>
    %14 = arith.extf %13 : vector<16x4xbf16> to vector<16x4xf32>
    %15 = arith.subf %12, %14 : vector<16x4xf32>
    %16 = arith.truncf %15 : vector<16x4xf32> to vector<16x4xbf16>
    %17 = arith.extf %16 : vector<16x4xbf16> to vector<16x4xf32>
    %18 = arith.subf %15, %17 : vector<16x4xf32>
    %19 = arith.truncf %18 : vector<16x4xf32> to vector<16x4xbf16>
    %cst = arith.constant dense<0.000000e+00> : vector<16x128xf32>
    %20 = tpu.matmul %13, %11, %cst {dimension_numbers = #tpu.dot_dimension_numbers<[1], [0], [0], [1], [0, 0, 1, 1], [], []>} : vector<16x4xbf16>, vector<4x128xbf16>, vector<16x128xf32> -> vector<16x128xf32>
    %cst_2 = arith.constant dense<0.000000e+00> : vector<16x128xf32>
    %21 = tpu.matmul %16, %11, %cst_2 {dimension_numbers = #tpu.dot_dimension_numbers<[1], [0], [0], [1], [0, 0, 1, 1], [], []>} : vector<16x4xbf16>, vector<4x128xbf16>, vector<16x128xf32> -> vector<16x128xf32>
    %22 = arith.addf %20, %21 : vector<16x128xf32>
    %cst_3 = arith.constant dense<0.000000e+00> : vector<16x128xf32>
    %23 = tpu.matmul %19, %11, %cst_3 {dimension_numbers = #tpu.dot_dimension_numbers<[1], [0], [0], [1], [0, 0, 1, 1], [], []>} : vector<16x4xbf16>, vector<4x128xbf16>, vector<16x128xf32> -> vector<16x128xf32>
    %24 = arith.addf %22, %23 : vector<16x128xf32>
    %c0_4 = arith.constant 0 : index
    %c0_5 = arith.constant 0 : index
    %25 = vector.load %arg3[%c0_4, %c0_5] : memref<16x128xf32, #tpu.memory_space<vmem>>, vector<16x128xf32>
    tpu.vector_store %arg3[%c0_4, %c0_5], %24 {strides = array<i32>} : memref<16x128xf32, #tpu.memory_space<vmem>>, vector<16x128xf32>,
    return
  }
  func.func @transform_0(%arg0: i32, %arg1: i32) -> (i32, i32) {
    %c0_i32 = arith.constant 0 : i32
    return %arg0, %arg1 : i32, i32
  }
  func.func @transform_1(%arg0: i32, %arg1: i32) -> (i32, i32) {
    %c0_i32 = arith.constant 0 : i32
    return %arg0, %arg1 : i32, i32
  }
}

</mosaic_0001>

<llo_original>
// kernel: tpu_custom_call.1
$region0: #{tpu_custom_call.1}
  #allocation0 [shape = 'u32[]', space=smem, size = 0x4, offset = 0x4, fixed_abs, tag = 'smem constant byte address 0x4 - core index']
  #allocation1 [shape = 'u32[72,128]{1,0:T(1,128)}', space=vmem, size = 0x9000, scoped, tag = 'internal scratch']
  %s0 = inlined_call_operand.vmem [shape: f32[16,4], index: 0, kind: input, shape index: {}]
  %s1 = inlined_call_operand.hbm [shape: f32[16,128], index: 1, kind: output, shape index: {}]
  %s2 = sld [smem:[#allocation0]]
  $region14: #{tpu_custom_call.1} parent=0
    _
  %s4 = ssub.s32 1, %s2
  %s5 = scalar_select 0, %s4, %s2
  $region1: #{tpu_custom_call.1} parent=0
    #allocation2 [shape = 'u8[8192]{0}', space=vmem, size = 0x2000, scoped, tag = 'output window, operand 0, single buffered']
    #allocation3 [shape = 's32[1]{0}', space=sflag, size = 0x4, scoped, tag = 'scoped memory for tpu_custom_call.1']
    %6 = vsyncpa [#allocation3], 0
    // Predicated region
    $region2: #{tpu_custom_call.1} parent=1 // pred_check
      _
    $region3: #{tpu_custom_call.1} parent=1 // pred_check_branch
      %8 = sbr.rel (0) target = $region5
    $region4: #{tpu_custom_call.1} parent=1 // pred_region
      _
    $region5: #{tpu_custom_call.1} parent=1 // pred_fallthru
      _
    %v10 = vlaneseq
    %v11 = vand.u32 %v10, 127
    %v12 = vlaneseq
    %v13 = vshrl.u32 %v12, 7
    %v14 = vmul.u32 %v13, 32
    %vm15 = vcmp.ge.s32.totalorder %v11, %v14
    %v16 = vadd.s32 %v14, 32
    %vm17 = vcmp.lt.s32.totalorder %v11, %v16
    %vm18 = vmand %vm15, %vm17
    %v19 = vsel %vm18, 1, 0
    %v20 = vcvt.s32.f32 %v19
    %v21 = vpack.c.bf16 %v20, %v20
    %v22 = vld [vmem:[%s0] sm:$0xff]
    %v23 = vld [vmem:[%s0 + $0x8] sm:$0xff]
    %v24 = vpack.c.bf16 %v22, %v22
    %v25 = vpack.c.bf16 %v23, %v23
    %v26 = vunpack.c.l.bf16 %v24
    %v27 = vunpack.c.l.bf16 %v25
    %v28 = vsub.f32 %v22, %v26
    %v29 = vsub.f32 %v23, %v27
    %v30 = vpack.c.bf16 %v28, %v28
    %v31 = vpack.c.bf16 %v29, %v29
    %v32 = vunpack.c.l.bf16 %v30
    %v33 = vunpack.c.l.bf16 %v31
    %v34 = vsub.f32 %v28, %v32
    %v35 = vsub.f32 %v29, %v33
    %v36 = vpack.c.bf16 %v35, %v34
    %v39 = vunpack.c.l.b16 %v30
    %v40 = vunpack.c.l.b16 %v31
    %v41 = vpack.c.b16 %v40, %v39
    %vm42 = vcmask 31744
    %v44 = vsel %vm42, %v41, 0
    %vm46 = vcmask 1041408
    %v48 = vsel %vm46, %v21, 0
    %50 = vmatpush.bf16.msra.mxu0 0
    %51 = vmatpush.bf16.msra.mxu0 0
    %52 = vmatpush.bf16.msra.mxu0 0
    %53 = vmatpush.bf16.msra.mxu0 0
    %54 = vmatpush.bf16.msra.mxu0 0
    %55 = vmatpush.bf16.msra.mxu0 0
    %56 = vmatpush.bf16.msra.mxu0 0
    %57 = vmatpush.bf16.msra.mxu0 %v48
    %58 = vmatmul.bf16.gmra.mxu0 %v44
    %v59 = vpop.f32.mrf.mxu0
    %v60 = vadd.f32 0.0, %v59
    %v61 = vpop.f32.mrf.mxu0
    %v62 = vadd.f32 0.0, %v61
    %63 = vdwg.mxu0
    %v66 = vunpack.c.l.b16 %v24
    %v67 = vunpack.c.l.b16 %v25
    %v68 = vpack.c.b16 %v67, %v66
    %v70 = vsel %vm42, %v68, 0
    %72 = vmatpush.bf16.msra.mxu0 0
    %73 = vmatpush.bf16.msra.mxu0 0
    %74 = vmatpush.bf16.msra.mxu0 0
    %75 = vmatpush.bf16.msra.mxu0 0
    %76 = vmatpush.bf16.msra.mxu0 0
    %77 = vmatpush.bf16.msra.mxu0 0
    %78 = vmatpush.bf16.msra.mxu0 0
    %79 = vmatpush.bf16.msra.mxu0 %v48
    %80 = vmatmul.bf16.gmra.mxu0 %v70
    %v81 = vpop.f32.mrf.mxu0
    %v82 = vadd.f32 %v60, %v81
    %v83 = vpop.f32.mrf.mxu0
    %v84 = vadd.f32 %v62, %v83
    %85 = vdwg.mxu0
    %v87 = vsel %vm42, %v36, 0
    %89 = vmatpush.bf16.msra.mxu0 0
    %90 = vmatpush.bf16.msra.mxu0 0
    %91 = vmatpush.bf16.msra.mxu0 0
    %92 = vmatpush.bf16.msra.mxu0 0
    %93 = vmatpush.bf16.msra.mxu0 0
    %94 = vmatpush.bf16.msra.mxu0 0
    %95 = vmatpush.bf16.msra.mxu0 0
    %96 = vmatpush.bf16.msra.mxu0 %v48
    %97 = vmatmul.bf16.gmra.mxu0 %v87
    %v98 = vpop.f32.mrf.mxu0
    %v99 = vadd.f32 0.0, %v98
    %v100 = vpop.f32.mrf.mxu0
    %v101 = vadd.f32 0.0, %v100
    %102 = vdwg.mxu0
    %v103 = vadd.f32 %v82, %v99
    %v104 = vadd.f32 %v84, %v101
    %105 = vst [vmem:[#allocation2] sm:$0xff] %v103
    %106 = vst [vmem:[#allocation2 + $0x8] sm:$0xff] %v104
    // Predicated region
    $region6: #{tpu_custom_call.1} parent=1 // pred_check
      _
    $region7: #{tpu_custom_call.1} parent=1 // pred_check_branch
      %108 = sbr.rel (0) target = $region9
    $region8: #{tpu_custom_call.1} parent=1 // pred_region
      %110 = vsyncadd [#allocation3], 0
      %s111 = sshll.u32 [#allocation2], 4
      %s112 = int_to_ptr.vmem [resolvable:$true] %s111
      %s113 = sshll.u32 %s1, 4
      %s114 = int_to_ptr.hbm [resolvable:$true] %s113
      %119 = dma.vmem_to_hbm [thread:$0]  %s112, 256, %s114, [#allocation3], 128, 128, 8
    $region9: #{tpu_custom_call.1} parent=1 // pred_fallthru
      _
    // Predicated region
    $region10: #{tpu_custom_call.1} parent=1 // pred_check
      _
    $region11: #{tpu_custom_call.1} parent=1 // pred_check_branch
      %121 = sbr.rel (0) target = $region13
    $region12: #{tpu_custom_call.1} parent=1 // pred_region
      %123 = dma.done [#allocation3], 256
    $region13: #{tpu_custom_call.1} parent=1 // pred_fallthru
      _
    %124 = vsyncpa [#allocation3], 1

</llo_original>
